<compile_context>
chip_gen: v6e
topology: v6e:2x2x1
jax: 0.10.0
libtpu: 0.0.40
codegen_flags: <defaults>
</compile_context>

<pallas_src>
import functools

import jax
import jax.numpy as jnp
from jax.experimental import pallas as pl
from jax.experimental.pallas import tpu as pltpu


def _parallel_selection_kernel(f_ref, out_ref, *, asset_num, hidden_dim, group):
    # f_ref:   (TB, N*M) batch block of flattened features (f32 or bf16)
    # out_ref: (TB, P)   strict-upper-triangle dot products, P = N*(N-1)/2
    f = f_ref[...]
    if f.dtype != jnp.float32:
        # Upcast once after the load: DMA stays bf16 when the caller supplies
        # bf16, while the VPU math is f32 everywhere (v5e has no bf16 VALU).
        f = f.astype(jnp.float32)

    n, m = asset_num, hidden_dim
    # Hoist the per-asset slabs (static 32-lane slices) so each slab is sliced
    # once and reused by all pairs that touch it.
    slabs = [f[:, a * m:(a + 1) * m] for a in range(n)]

    # Strict-upper-triangle pair list in the same row-major order as
    # torch.triu_indices(N, N, 1) — pure Python constants baked into the trace.
    pairs = [(i, j) for i in range(n) for j in range(i + 1, n)]

    # Per-pair dot products on the VPU: elementwise multiply the two slabs and
    # reduce over M.  Pairs are processed (and stored) a few at a time so only
    # a handful of narrow temporaries are ever live, keeping VMEM pressure low
    # even with large batch tiles.
    for g0 in range(0, len(pairs), group):
        cols = []
        for (i, j) in pairs[g0:g0 + group]:
            d = jnp.sum(slabs[i] * slabs[j], axis=-1, keepdims=True)  # (TB, 1)
            cols.append(d)
        out_ref[:, g0:g0 + len(cols)] = (
            jnp.concatenate(cols, axis=-1).astype(out_ref.dtype))


def _pick_batch_block(batch: int, max_tb: int = 2048) -> int:
    """Batch-tile size (second-to-last block dim: multiple of 8, or the full batch)."""
    if batch > max_tb:
        # Many blocks: big tiles amortize the ~0.35us per-step pipeline overhead
        # and the grid is sharded across TensorCores ("parallel").  A ragged
        # tail block is masked by Pallas, so no jnp.pad copy is needed.
        return max_tb
    if batch >= 1024 and batch % 16 == 0:
        # Fits in one block, but is big enough that splitting it in two keeps
        # tiles large while letting both v7x TensorCores work.
        return batch // 2
    return batch  # single block (block dim == full array dim is always legal)


def parallel_selection_forward(features: jax.Array, asset_num: int, hidden_dim: int,
                               max_batch_block: int = 2048) -> jax.Array:
    """Pallas implementation of ParallelSelection.forward.

    features: any shape whose rows flatten to asset_num * hidden_dim entries
              (reshaped to (-1, asset_num * hidden_dim), exactly like the module).
    returns:  (B, asset_num*(asset_num-1)//2) float32, in torch.triu_indices order.
    """
    N, M = asset_num, hidden_dim
    P = N * (N - 1) // 2

    f = features.reshape(-1, N * M)
    if f.dtype not in (jnp.float32, jnp.bfloat16):
        f = f.astype(jnp.float32)
    B = f.shape[0]

    TB = _pick_batch_block(B, max_batch_block)
    grid = (pl.cdiv(B, TB),)

    kernel = functools.partial(_parallel_selection_kernel,
                               asset_num=N, hidden_dim=M, group=7)

    return pl.pallas_call(
        kernel,
        out_shape=jax.ShapeDtypeStruct((B, P), jnp.float32),
        grid_spec=pltpu.PrefetchScalarGridSpec(
            num_scalar_prefetch=0,
            grid=grid,
            in_specs=[pl.BlockSpec((TB, N * M), lambda b: (b, 0))],
            out_specs=pl.BlockSpec((TB, P), lambda b: (b, 0)),
        ),
        compiler_params=pltpu.CompilerParams(
            dimension_semantics=("parallel",),
            vmem_limit_bytes=32 * 1024 * 1024,
        ),
    )(f)


def _reference_forward(features, asset_num, hidden_dim):
    # Exact f32 elementwise reference (no MXU involved), equivalent to the
    # module's S = f @ f^T followed by the k=1 upper-triangle gather.
    f = features.reshape(-1, asset_num, hidden_dim).astype(jnp.float32)
    rows, cols = jnp.triu_indices(asset_num, k=1)
    return jnp.sum(f[:, rows, :] * f[:, cols, :], axis=-1)


if __name__ == "__main__":
    # Module hyperparameters (small, consistent with the forward pass):
    asset_num = 8                       # N
    hidden_dim = 32                     # M
    feature_dim = asset_num * hidden_dim
    batch = 2

    key = jax.random.PRNGKey(0)
    x = jax.random.normal(key, (batch, feature_dim), dtype=jnp.float32)

    out = parallel_selection_forward(x, asset_num, hidden_dim)
    out = jax.block_until_ready(out)

    ref = _reference_forward(x, asset_num, hidden_dim)
    assert out.shape == (batch, asset_num * (asset_num - 1) // 2), out.shape
    assert jnp.allclose(out, ref, atol=1e-4, rtol=1e-4), "mismatch vs reference"

    print("KERNEL_OK")
</pallas_src>

<mosaic_0001>
module attributes {stable_mosaic.version = 11 : i64} {
  func.func @_parallel_selection_kernel(%arg0: i32, %arg1: memref<2x256xf32, #tpu.memory_space<vmem>>, %arg2: memref<2x28xf32, #tpu.memory_space<vmem>>) attributes {dimension_semantics = [#tpu.dimension_semantics<parallel>], iteration_bounds = array<i64: 1>, scalar_prefetch = 0 : i64, scratch_operands = 0 : i64, tpu.core_type = #tpu.core_type<tc>, window_params = [{transform_indices = @transform_0, window_bounds = array<i64: 2, 256>}, {transform_indices = @transform_1, window_bounds = array<i64: 2, 28>}]} {
    %c0 = arith.constant 0 : index
    %c0_0 = arith.constant 0 : index
    %0 = vector.load %arg1[%c0, %c0_0] : memref<2x256xf32, #tpu.memory_space<vmem>>, vector<2x256xf32>
    %1 = vector.extract_strided_slice %0 {offsets = [0, 0], sizes = [2, 32], strides = [1, 1]} : vector<2x256xf32> to vector<2x32xf32>
    %2 = vector.extract_strided_slice %0 {offsets = [0, 32], sizes = [2, 32], strides = [1, 1]} : vector<2x256xf32> to vector<2x32xf32>
    %3 = vector.extract_strided_slice %0 {offsets = [0, 64], sizes = [2, 32], strides = [1, 1]} : vector<2x256xf32> to vector<2x32xf32>
    %4 = vector.extract_strided_slice %0 {offsets = [0, 96], sizes = [2, 32], strides = [1, 1]} : vector<2x256xf32> to vector<2x32xf32>
    %5 = vector.extract_strided_slice %0 {offsets = [0, 128], sizes = [2, 32], strides = [1, 1]} : vector<2x256xf32> to vector<2x32xf32>
    %6 = vector.extract_strided_slice %0 {offsets = [0, 160], sizes = [2, 32], strides = [1, 1]} : vector<2x256xf32> to vector<2x32xf32>
    %7 = vector.extract_strided_slice %0 {offsets = [0, 192], sizes = [2, 32], strides = [1, 1]} : vector<2x256xf32> to vector<2x32xf32>
    %8 = vector.extract_strided_slice %0 {offsets = [0, 224], sizes = [2, 32], strides = [1, 1]} : vector<2x256xf32> to vector<2x32xf32>
    %9 = arith.mulf %1, %2 : vector<2x32xf32>
    %cst = arith.constant dense<0.000000e+00> : vector<2xf32>
    %10 = vector.multi_reduction <add>, %9, %cst [1] : vector<2x32xf32> to vector<2xf32>
    %11 = vector.shape_cast %10 : vector<2xf32> to vector<2x1xf32>
    %12 = arith.mulf %1, %3 : vector<2x32xf32>
    %cst_1 = arith.constant dense<0.000000e+00> : vector<2xf32>
    %13 = vector.multi_reduction <add>, %12, %cst_1 [1] : vector<2x32xf32> to vector<2xf32>
    %14 = vector.shape_cast %13 : vector<2xf32> to vector<2x1xf32>
    %15 = arith.mulf %1, %4 : vector<2x32xf32>
    %cst_2 = arith.constant dense<0.000000e+00> : vector<2xf32>
    %16 = vector.multi_reduction <add>, %15, %cst_2 [1] : vector<2x32xf32> to vector<2xf32>
    %17 = vector.shape_cast %16 : vector<2xf32> to vector<2x1xf32>
    %18 = arith.mulf %1, %5 : vector<2x32xf32>
    %cst_3 = arith.constant dense<0.000000e+00> : vector<2xf32>
    %19 = vector.multi_reduction <add>, %18, %cst_3 [1] : vector<2x32xf32> to vector<2xf32>
    %20 = vector.shape_cast %19 : vector<2xf32> to vector<2x1xf32>
    %21 = arith.mulf %1, %6 : vector<2x32xf32>
    %cst_4 = arith.constant dense<0.000000e+00> : vector<2xf32>
    %22 = vector.multi_reduction <add>, %21, %cst_4 [1] : vector<2x32xf32> to vector<2xf32>
    %23 = vector.shape_cast %22 : vector<2xf32> to vector<2x1xf32>
    %24 = arith.mulf %1, %7 : vector<2x32xf32>
    %cst_5 = arith.constant dense<0.000000e+00> : vector<2xf32>
    %25 = vector.multi_reduction <add>, %24, %cst_5 [1] : vector<2x32xf32> to vector<2xf32>
    %26 = vector.shape_cast %25 : vector<2xf32> to vector<2x1xf32>
    %27 = arith.mulf %1, %8 : vector<2x32xf32>
    %cst_6 = arith.constant dense<0.000000e+00> : vector<2xf32>
    %28 = vector.multi_reduction <add>, %27, %cst_6 [1] : vector<2x32xf32> to vector<2xf32>
    %29 = vector.shape_cast %28 : vector<2xf32> to vector<2x1xf32>
    %30 = tpu.concatenate %11, %14, %17, %20, %23, %26, %29 in 1 : vector<2x1xf32>, vector<2x1xf32>, vector<2x1xf32>, vector<2x1xf32>, vector<2x1xf32>, vector<2x1xf32>, vector<2x1xf32> -> vector<2x7xf32>
    %c0_7 = arith.constant 0 : index
    %c0_8 = arith.constant 0 : index
    %31 = vector.load %arg2[%c0_7, %c0_8] : memref<2x28xf32, #tpu.memory_space<vmem>>, vector<2x7xf32>
    tpu.vector_store %arg2[%c0_7, %c0_8], %30 {strides = array<i32>} : memref<2x28xf32, #tpu.memory_space<vmem>>, vector<2x7xf32>,
    %32 = arith.mulf %2, %3 : vector<2x32xf32>
    %cst_9 = arith.constant dense<0.000000e+00> : vector<2xf32>
    %33 = vector.multi_reduction <add>, %32, %cst_9 [1] : vector<2x32xf32> to vector<2xf32>
    %34 = vector.shape_cast %33 : vector<2xf32> to vector<2x1xf32>
    %35 = arith.mulf %2, %4 : vector<2x32xf32>
    %cst_10 = arith.constant dense<0.000000e+00> : vector<2xf32>
    %36 = vector.multi_reduction <add>, %35, %cst_10 [1] : vector<2x32xf32> to vector<2xf32>
    %37 = vector.shape_cast %36 : vector<2xf32> to vector<2x1xf32>
    %38 = arith.mulf %2, %5 : vector<2x32xf32>
    %cst_11 = arith.constant dense<0.000000e+00> : vector<2xf32>
    %39 = vector.multi_reduction <add>, %38, %cst_11 [1] : vector<2x32xf32> to vector<2xf32>
    %40 = vector.shape_cast %39 : vector<2xf32> to vector<2x1xf32>
    %41 = arith.mulf %2, %6 : vector<2x32xf32>
    %cst_12 = arith.constant dense<0.000000e+00> : vector<2xf32>
    %42 = vector.multi_reduction <add>, %41, %cst_12 [1] : vector<2x32xf32> to vector<2xf32>
    %43 = vector.shape_cast %42 : vector<2xf32> to vector<2x1xf32>
    %44 = arith.mulf %2, %7 : vector<2x32xf32>
    %cst_13 = arith.constant dense<0.000000e+00> : vector<2xf32>
    %45 = vector.multi_reduction <add>, %44, %cst_13 [1] : vector<2x32xf32> to vector<2xf32>
    %46 = vector.shape_cast %45 : vector<2xf32> to vector<2x1xf32>
    %47 = arith.mulf %2, %8 : vector<2x32xf32>
    %cst_14 = arith.constant dense<0.000000e+00> : vector<2xf32>
    %48 = vector.multi_reduction <add>, %47, %cst_14 [1] : vector<2x32xf32> to vector<2xf32>
    %49 = vector.shape_cast %48 : vector<2xf32> to vector<2x1xf32>
    %50 = arith.mulf %3, %4 : vector<2x32xf32>
    %cst_15 = arith.constant dense<0.000000e+00> : vector<2xf32>
    %51 = vector.multi_reduction <add>, %50, %cst_15 [1] : vector<2x32xf32> to vector<2xf32>
    %52 = vector.shape_cast %51 : vector<2xf32> to vector<2x1xf32>
    %53 = tpu.concatenate %34, %37, %40, %43, %46, %49, %52 in 1 : vector<2x1xf32>, vector<2x1xf32>, vector<2x1xf32>, vector<2x1xf32>, vector<2x1xf32>, vector<2x1xf32>, vector<2x1xf32> -> vector<2x7xf32>
    %c0_16 = arith.constant 0 : index
    %c7 = arith.constant 7 : index
    %54 = vector.load %arg2[%c0_16, %c7] : memref<2x28xf32, #tpu.memory_space<vmem>>, vector<2x7xf32>
    tpu.vector_store %arg2[%c0_16, %c7], %53 {strides = array<i32>} : memref<2x28xf32, #tpu.memory_space<vmem>>, vector<2x7xf32>,
    %55 = arith.mulf %3, %5 : vector<2x32xf32>
    %cst_17 = arith.constant dense<0.000000e+00> : vector<2xf32>
    %56 = vector.multi_reduction <add>, %55, %cst_17 [1] : vector<2x32xf32> to vector<2xf32>
    %57 = vector.shape_cast %56 : vector<2xf32> to vector<2x1xf32>
    %58 = arith.mulf %3, %6 : vector<2x32xf32>
    %cst_18 = arith.constant dense<0.000000e+00> : vector<2xf32>
    %59 = vector.multi_reduction <add>, %58, %cst_18 [1] : vector<2x32xf32> to vector<2xf32>
    %60 = vector.shape_cast %59 : vector<2xf32> to vector<2x1xf32>
    %61 = arith.mulf %3, %7 : vector<2x32xf32>
    %cst_19 = arith.constant dense<0.000000e+00> : vector<2xf32>
    %62 = vector.multi_reduction <add>, %61, %cst_19 [1] : vector<2x32xf32> to vector<2xf32>
    %63 = vector.shape_cast %62 : vector<2xf32> to vector<2x1xf32>
    %64 = arith.mulf %3, %8 : vector<2x32xf32>
    %cst_20 = arith.constant dense<0.000000e+00> : vector<2xf32>
    %65 = vector.multi_reduction <add>, %64, %cst_20 [1] : vector<2x32xf32> to vector<2xf32>
    %66 = vector.shape_cast %65 : vector<2xf32> to vector<2x1xf32>
    %67 = arith.mulf %4, %5 : vector<2x32xf32>
    %cst_21 = arith.constant dense<0.000000e+00> : vector<2xf32>
    %68 = vector.multi_reduction <add>, %67, %cst_21 [1] : vector<2x32xf32> to vector<2xf32>
    %69 = vector.shape_cast %68 : vector<2xf32> to vector<2x1xf32>
    %70 = arith.mulf %4, %6 : vector<2x32xf32>
    %cst_22 = arith.constant dense<0.000000e+00> : vector<2xf32>
    %71 = vector.multi_reduction <add>, %70, %cst_22 [1] : vector<2x32xf32> to vector<2xf32>
    %72 = vector.shape_cast %71 : vector<2xf32> to vector<2x1xf32>
    %73 = arith.mulf %4, %7 : vector<2x32xf32>
    %cst_23 = arith.constant dense<0.000000e+00> : vector<2xf32>
    %74 = vector.multi_reduction <add>, %73, %cst_23 [1] : vector<2x32xf32> to vector<2xf32>
    %75 = vector.shape_cast %74 : vector<2xf32> to vector<2x1xf32>
    %76 = tpu.concatenate %57, %60, %63, %66, %69, %72, %75 in 1 : vector<2x1xf32>, vector<2x1xf32>, vector<2x1xf32>, vector<2x1xf32>, vector<2x1xf32>, vector<2x1xf32>, vector<2x1xf32> -> vector<2x7xf32>
    %c0_24 = arith.constant 0 : index
    %c14 = arith.constant 14 : index
    %77 = vector.load %arg2[%c0_24, %c14] : memref<2x28xf32, #tpu.memory_space<vmem>>, vector<2x7xf32>
    tpu.vector_store %arg2[%c0_24, %c14], %76 {strides = array<i32>} : memref<2x28xf32, #tpu.memory_space<vmem>>, vector<2x7xf32>,
    %78 = arith.mulf %4, %8 : vector<2x32xf32>
    %cst_25 = arith.constant dense<0.000000e+00> : vector<2xf32>
    %79 = vector.multi_reduction <add>, %78, %cst_25 [1] : vector<2x32xf32> to vector<2xf32>
    %80 = vector.shape_cast %79 : vector<2xf32> to vector<2x1xf32>
    %81 = arith.mulf %5, %6 : vector<2x32xf32>
    %cst_26 = arith.constant dense<0.000000e+00> : vector<2xf32>
    %82 = vector.multi_reduction <add>, %81, %cst_26 [1] : vector<2x32xf32> to vector<2xf32>
    %83 = vector.shape_cast %82 : vector<2xf32> to vector<2x1xf32>
    %84 = arith.mulf %5, %7 : vector<2x32xf32>
    %cst_27 = arith.constant dense<0.000000e+00> : vector<2xf32>
    %85 = vector.multi_reduction <add>, %84, %cst_27 [1] : vector<2x32xf32> to vector<2xf32>
    %86 = vector.shape_cast %85 : vector<2xf32> to vector<2x1xf32>
    %87 = arith.mulf %5, %8 : vector<2x32xf32>
    %cst_28 = arith.constant dense<0.000000e+00> : vector<2xf32>
    %88 = vector.multi_reduction <add>, %87, %cst_28 [1] : vector<2x32xf32> to vector<2xf32>
    %89 = vector.shape_cast %88 : vector<2xf32> to vector<2x1xf32>
    %90 = arith.mulf %6, %7 : vector<2x32xf32>
    %cst_29 = arith.constant dense<0.000000e+00> : vector<2xf32>
    %91 = vector.multi_reduction <add>, %90, %cst_29 [1] : vector<2x32xf32> to vector<2xf32>
    %92 = vector.shape_cast %91 : vector<2xf32> to vector<2x1xf32>
    %93 = arith.mulf %6, %8 : vector<2x32xf32>
    %cst_30 = arith.constant dense<0.000000e+00> : vector<2xf32>
    %94 = vector.multi_reduction <add>, %93, %cst_30 [1] : vector<2x32xf32> to vector<2xf32>
    %95 = vector.shape_cast %94 : vector<2xf32> to vector<2x1xf32>
    %96 = arith.mulf %7, %8 : vector<2x32xf32>
    %cst_31 = arith.constant dense<0.000000e+00> : vector<2xf32>
    %97 = vector.multi_reduction <add>, %96, %cst_31 [1] : vector<2x32xf32> to vector<2xf32>
    %98 = vector.shape_cast %97 : vector<2xf32> to vector<2x1xf32>
    %99 = tpu.concatenate %80, %83, %86, %89, %92, %95, %98 in 1 : vector<2x1xf32>, vector<2x1xf32>, vector<2x1xf32>, vector<2x1xf32>, vector<2x1xf32>, vector<2x1xf32>, vector<2x1xf32> -> vector<2x7xf32>
    %c0_32 = arith.constant 0 : index
    %c21 = arith.constant 21 : index
    %100 = vector.load %arg2[%c0_32, %c21] : memref<2x28xf32, #tpu.memory_space<vmem>>, vector<2x7xf32>
    tpu.vector_store %arg2[%c0_32, %c21], %99 {strides = array<i32>} : memref<2x28xf32, #tpu.memory_space<vmem>>, vector<2x7xf32>,
    return
  }
  func.func @transform_0(%arg0: i32) -> (i32, i32) {
    %c0_i32 = arith.constant 0 : i32
    %c0_i32_0 = arith.constant 0 : i32
    return %arg0, %c0_i32 : i32, i32
  }
  func.func @transform_1(%arg0: i32) -> (i32, i32) {
    %c0_i32 = arith.constant 0 : i32
    %c0_i32_0 = arith.constant 0 : i32
    return %arg0, %c0_i32 : i32, i32
  }
}

</mosaic_0001>

<llo_original>
// kernel: tpu_custom_call.1
$region0: #{tpu_custom_call.1}
  #allocation0 [shape = 'u32[]', space=smem, size = 0x4, offset = 0x4, fixed_abs, tag = 'smem constant byte address 0x4 - core index']
  #allocation1 [shape = 'u32[144,128]{1,0:T(1,128)}', space=vmem, size = 0x12000, scoped, tag = 'internal scratch']
  %s0 = inlined_call_operand.hbm [shape: f32[2,256], index: 0, kind: input, shape index: {}]
  %s1 = inlined_call_operand.hbm [shape: f32[2,28], index: 1, kind: output, shape index: {}]
  %s2 = sld [smem:[#allocation0]]
  $region18: #{tpu_custom_call.1} parent=0
    _
  %s4 = ssub.s32 1, %s2
  %s5 = scalar_select 0, %s4, %s2
  $region1: #{tpu_custom_call.1} parent=0
    #allocation2 [shape = 'u8[2048]{0}', space=vmem, size = 0x800, scoped, tag = 'input window, operand 0, single buffered']
    #allocation3 [shape = 's32[1]{0}', space=sflag, size = 0x4, scoped, tag = 'scoped memory for tpu_custom_call.1']
    #allocation4 [shape = 's32[1]{0}', space=sflag, size = 0x4, scoped, tag = 'scoped memory for tpu_custom_call.1']
    #allocation5 [shape = 'u8[1024]{0}', space=vmem, size = 0x400, scoped, tag = 'output window, operand 0, single buffered']
    %6 = vsyncpa [#allocation3], 0
    %7 = vsyncpa [#allocation4], 0
    // Predicated region
    $region2: #{tpu_custom_call.1} parent=1 // pred_check
      _
    $region3: #{tpu_custom_call.1} parent=1 // pred_check_branch
      %9 = sbr.rel (0) target = $region5
    $region4: #{tpu_custom_call.1} parent=1 // pred_region
      %s11 = ssub.s32 64, 64
      %12 = vsyncadd [#allocation3], %s11
      %s14 = sshll.u32 [#allocation2], 4
      %s15 = int_to_ptr.vmem [resolvable:$true] %s14
      %17 = dma.hbm_to_vmem [thread:$0]  %s0, 64, %s15, [#allocation3]
    $region5: #{tpu_custom_call.1} parent=1 // pred_fallthru
      _
    // Predicated region
    $region6: #{tpu_custom_call.1} parent=1 // pred_check
      _
    $region7: #{tpu_custom_call.1} parent=1 // pred_check_branch
      %19 = sbr.rel (0) target = $region9
    $region8: #{tpu_custom_call.1} parent=1 // pred_region
      %20 = dma.done [#allocation3], 64
    $region9: #{tpu_custom_call.1} parent=1 // pred_fallthru
      _
    %v21 = vld [vmem:[#allocation2] sm:$0xf]
    %23 = vrot.lane.b32.xlu0 %v21, 96
    %v24 = vpop.permute.xlu0 %23
    %v26 = vmul.f32 %v21, %v24
    %vm27 = vcmask 254976
    %v28 = vsel %vm27, %v26, 0.0
    %29 = vadd.xlane.f32.xlu0 %v28
    %v30 = vpop.xlane.xlu0 %29
    %31 = vrot.lane.b32.xlu0 %v21, 64
    %v32 = vpop.permute.xlu0 %31
    %v34 = vmul.f32 %v21, %v32
    %v35 = vsel %vm27, %v34, 0.0
    %36 = vadd.xlane.f32.xlu0 %v35
    %v37 = vpop.xlane.xlu0 %36
    %38 = vrot.lane.b32.xlu0 %v21, 32
    %v39 = vpop.permute.xlu0 %38
    %v41 = vmul.f32 %v21, %v39
    %v42 = vsel %vm27, %v41, 0.0
    %43 = vadd.xlane.f32.xlu0 %v42
    %v44 = vpop.xlane.xlu0 %43
    %v45 = vrot.slane %v21, 2
    %v47 = vmul.f32 %v21, %v45
    %v48 = vsel %vm27, %v47, 0.0
    %49 = vadd.xlane.f32.xlu0 %v48
    %v50 = vpop.xlane.xlu0 %49
    %v51 = vrot.slane %v24, 2
    %v53 = vmul.f32 %v21, %v51
    %v54 = vsel %vm27, %v53, 0.0
    %55 = vadd.xlane.f32.xlu0 %v54
    %v56 = vpop.xlane.xlu0 %55
    %v57 = vrot.slane %v32, 2
    %v59 = vmul.f32 %v21, %v57
    %v60 = vsel %vm27, %v59, 0.0
    %61 = vadd.xlane.f32.xlu0 %v60
    %v62 = vpop.xlane.xlu0 %61
    %v63 = vrot.slane %v39, 2
    %v65 = vmul.f32 %v21, %v63
    %v66 = vsel %vm27, %v65, 0.0
    %67 = vadd.xlane.f32.xlu0 %v66
    %v68 = vpop.xlane.xlu0 %67
    %vm69 = vcmask 7168
    %v70 = vsel %vm69, %v30, %v37
    %vm71 = vcmask 15360
    %v72 = vsel %vm71, %v70, %v44
    %vm73 = vcmask 23552
    %v74 = vsel %vm73, %v72, %v50
    %vm75 = vcmask 31744
    %v76 = vsel %vm75, %v74, %v56
    %vm77 = vcmask 39936
    %v78 = vsel %vm77, %v76, %v62
    %vm79 = vcmask 48128
    %v80 = vsel %vm79, %v78, %v68
    %vm81 = vcmask 50176
    %82 = vst.msk [vmem:[#allocation5] sm:$0x3] %vm81, %v80
    %v85 = vunpack.c.l.s4 1983009808
    %v86 = vunpack.c.0.s8 %v85
    %v87 = vlaneseq
    %v88 = vshrl.u32 %v87, 7
    %v89 = vsub.s32 %v86, %v88
    %v90 = vrot.slane %v26, %v89
    %91 = vrot.lane.b32.xlu0 %v90, 96
    %v92 = vpop.permute.xlu0 %91
    %v94 = vsel %vm27, %v92, 0.0
    %95 = vadd.xlane.f32.xlu0 %v94
    %v96 = vpop.xlane.xlu0 %95
    %v99 = vunpack.c.l.s4 1983009808
    %v100 = vunpack.c.0.s8 %v99
    %v101 = vlaneseq
    %v102 = vshrl.u32 %v101, 7
    %v103 = vsub.s32 %v100, %v102
    %v104 = vrot.slane %v34, %v103
    %105 = vrot.lane.b32.xlu0 %v104, 96
    %v106 = vpop.permute.xlu0 %105
    %v108 = vsel %vm27, %v106, 0.0
    %109 = vadd.xlane.f32.xlu0 %v108
    %v110 = vpop.xlane.xlu0 %109
    %vm111 = vcmask 261120
    %v112 = vsel %vm111, %v39, %v63
    %v114 = vmul.f32 %v21, %v112
    %v117 = vunpack.c.l.s4 1983009808
    %v118 = vunpack.c.0.s8 %v117
    %v119 = vlaneseq
    %v120 = vshrl.u32 %v119, 7
    %v121 = vsub.s32 %v118, %v120
    %v122 = vrot.slane %v114, %v121
    %123 = vrot.lane.b32.xlu0 %v122, 96
    %v124 = vpop.permute.xlu0 %123
    %v126 = vsel %vm27, %v124, 0.0
    %127 = vadd.xlane.f32.xlu0 %v126
    %v128 = vpop.xlane.xlu0 %127
    %v131 = vunpack.c.l.s4 1983009808
    %v132 = vunpack.c.0.s8 %v131
    %v133 = vlaneseq
    %v134 = vshrl.u32 %v133, 7
    %v135 = vsub.s32 %v132, %v134
    %v136 = vrot.slane %v47, %v135
    %137 = vrot.lane.b32.xlu0 %v136, 96
    %v138 = vpop.permute.xlu0 %137
    %v140 = vsel %vm27, %v138, 0.0
    %141 = vadd.xlane.f32.xlu0 %v140
    %v142 = vpop.xlane.xlu0 %141
    %v145 = vunpack.c.l.s4 1983009808
    %v146 = vunpack.c.0.s8 %v145
    %v147 = vlaneseq
    %v148 = vshrl.u32 %v147, 7
    %v149 = vsub.s32 %v146, %v148
    %v150 = vrot.slane %v53, %v149
    %151 = vrot.lane.b32.xlu0 %v150, 96
    %v152 = vpop.permute.xlu0 %151
    %v154 = vsel %vm27, %v152, 0.0
    %155 = vadd.xlane.f32.xlu0 %v154
    %v156 = vpop.xlane.xlu0 %155
    %v159 = vunpack.c.l.s4 1983009808
    %v160 = vunpack.c.0.s8 %v159
    %v161 = vlaneseq
    %v162 = vshrl.u32 %v161, 7
    %v163 = vsub.s32 %v160, %v162
    %v164 = vrot.slane %v59, %v163
    %165 = vrot.lane.b32.xlu0 %v164, 96
    %v166 = vpop.permute.xlu0 %165
    %v168 = vsel %vm27, %v166, 0.0
    %169 = vadd.xlane.f32.xlu0 %v168
    %v170 = vpop.xlane.xlu0 %169
    %171 = vrot.lane.b32.xlu0 %v90, 64
    %v172 = vpop.permute.xlu0 %171
    %v174 = vsel %vm27, %v172, 0.0
    %175 = vadd.xlane.f32.xlu0 %v174
    %v176 = vpop.xlane.xlu0 %175
    %v177 = vsel %vm69, %v96, %v110
    %v178 = vsel %vm71, %v177, %v128
    %v179 = vsel %vm73, %v178, %v142
    %v180 = vsel %vm75, %v179, %v156
    %v181 = vsel %vm77, %v180, %v170
    %v182 = vsel %vm79, %v181, %v176
    %184 = vrot.lane.b32.xlu0 %v182, 7
    %v185 = vpop.permute.xlu0 %184
    %vm187 = vcmask 107576
    %188 = vst.msk [vmem:[#allocation5] sm:$0x3] %vm187, %v185
    %vm189 = vcmask 523264
    %v190 = vsel %vm189, %v32, %v57
    %v192 = vmul.f32 %v21, %v190
    %v195 = vunpack.c.l.s4 1983009808
    %v196 = vunpack.c.0.s8 %v195
    %v197 = vlaneseq
    %v198 = vshrl.u32 %v197, 7
    %v199 = vsub.s32 %v196, %v198
    %v200 = vrot.slane %v192, %v199
    %201 = vrot.lane.b32.xlu0 %v200, 64
    %v202 = vpop.permute.xlu0 %201
    %v204 = vsel %vm27, %v202, 0.0
    %205 = vadd.xlane.f32.xlu0 %v204
    %v206 = vpop.xlane.xlu0 %205
    %207 = vrot.lane.b32.xlu0 %v122, 64
    %v208 = vpop.permute.xlu0 %207
    %v210 = vsel %vm27, %v208, 0.0
    %211 = vadd.xlane.f32.xlu0 %v210
    %v212 = vpop.xlane.xlu0 %211
    %213 = vrot.lane.b32.xlu0 %v136, 64
    %v214 = vpop.permute.xlu0 %213
    %v216 = vsel %vm27, %v214, 0.0
    %217 = vadd.xlane.f32.xlu0 %v216
    %v218 = vpop.xlane.xlu0 %217
    %219 = vrot.lane.b32.xlu0 %v150, 64
    %v220 = vpop.permute.xlu0 %219
    %v222 = vsel %vm27, %v220, 0.0
    %223 = vadd.xlane.f32.xlu0 %v222
    %v224 = vpop.xlane.xlu0 %223
    %vm225 = vcmask 785408
    %v226 = vsel %vm225, %v24, %v51
    %v228 = vmul.f32 %v21, %v226
    %v231 = vunpack.c.l.s4 1983009808
    %v232 = vunpack.c.0.s8 %v231
    %v233 = vlaneseq
    %v234 = vshrl.u32 %v233, 7
    %v235 = vsub.s32 %v232, %v234
    %v236 = vrot.slane %v228, %v235
    %237 = vrot.lane.b32.xlu0 %v236, 32
    %v238 = vpop.permute.xlu0 %237
    %v240 = vsel %vm27, %v238, 0.0
    %241 = vadd.xlane.f32.xlu0 %v240
    %v242 = vpop.xlane.xlu0 %241
    %243 = vrot.lane.b32.xlu0 %v200, 32
    %v244 = vpop.permute.xlu0 %243
    %v246 = vsel %vm27, %v244, 0.0
    %247 = vadd.xlane.f32.xlu0 %v246
    %v248 = vpop.xlane.xlu0 %247
    %249 = vrot.lane.b32.xlu0 %v122, 32
    %v250 = vpop.permute.xlu0 %249
    %v252 = vsel %vm27, %v250, 0.0
    %253 = vadd.xlane.f32.xlu0 %v252
    %v254 = vpop.xlane.xlu0 %253
    %v255 = vsel %vm69, %v206, %v212
    %v256 = vsel %vm71, %v255, %v218
    %v257 = vsel %vm73, %v256, %v224
    %v258 = vsel %vm75, %v257, %v242
    %v259 = vsel %vm77, %v258, %v248
    %v260 = vsel %vm79, %v259, %v254
    %262 = vrot.lane.b32.xlu0 %v260, 14
    %v263 = vpop.permute.xlu0 %262
    %vm265 = vcmask 164976
    %266 = vst.msk [vmem:[#allocation5] sm:$0x3] %vm265, %v263
    %267 = vrot.lane.b32.xlu0 %v136, 32
    %v268 = vpop.permute.xlu0 %267
    %v270 = vsel %vm27, %v268, 0.0
    %271 = vadd.xlane.f32.xlu0 %v270
    %v272 = vpop.xlane.xlu0 %271
    %v273 = vmul.f32 %v45, %v51
    %v274 = vsel %vm27, %v273, 0.0
    %275 = vadd.xlane.f32.xlu0 %v274
    %v276 = vpop.xlane.xlu0 %275
    %v277 = vmul.f32 %v45, %v57
    %v278 = vsel %vm27, %v277, 0.0
    %279 = vadd.xlane.f32.xlu0 %v278
    %v280 = vpop.xlane.xlu0 %279
    %v281 = vmul.f32 %v45, %v63
    %v282 = vsel %vm27, %v281, 0.0
    %283 = vadd.xlane.f32.xlu0 %v282
    %v284 = vpop.xlane.xlu0 %283
    %v285 = vmul.f32 %v51, %v57
    %v286 = vsel %vm27, %v285, 0.0
    %287 = vadd.xlane.f32.xlu0 %v286
    %v288 = vpop.xlane.xlu0 %287
    %v289 = vmul.f32 %v51, %v63
    %v290 = vsel %vm27, %v289, 0.0
    %291 = vadd.xlane.f32.xlu0 %v290
    %v292 = vpop.xlane.xlu0 %291
    %v293 = vmul.f32 %v57, %v63
    %v294 = vsel %vm27, %v293, 0.0
    %295 = vadd.xlane.f32.xlu0 %v294
    %v296 = vpop.xlane.xlu0 %295
    %v297 = vsel %vm69, %v272, %v276
    %v298 = vsel %vm71, %v297, %v280
    %v299 = vsel %vm73, %v298, %v284
    %v300 = vsel %vm75, %v299, %v288
    %v301 = vsel %vm77, %v300, %v292
    %v302 = vsel %vm79, %v301, %v296
    %304 = vrot.lane.b32.xlu0 %v302, 21
    %v305 = vpop.permute.xlu0 %304
    %vm307 = vcmask 222376
    %308 = vst.msk [vmem:[#allocation5] sm:$0x3] %vm307, %v305
    // Predicated region
    $region10: #{tpu_custom_call.1} parent=1 // pred_check
      _
    $region11: #{tpu_custom_call.1} parent=1 // pred_check_branch
      %310 = sbr.rel (0) target = $region13
    $region12: #{tpu_custom_call.1} parent=1 // pred_region
      %s312 = ssub.s32 32, 32
      %313 = vsyncadd [#allocation4], %s312
      %s315 = sshll.u32 [#allocation5], 4
      %s316 = int_to_ptr.vmem [resolvable:$true] %s315
      %318 = dma.vmem_to_hbm [thread:$0]  %s316, 32, %s1, [#allocation4]
    $region13: #{tpu_custom_call.1} parent=1 // pred_fallthru
      _
    // Predicated region
    $region14: #{tpu_custom_call.1} parent=1 // pred_check
      _
    $region15: #{tpu_custom_call.1} parent=1 // pred_check_branch
      %320 = sbr.rel (0) target = $region17
    $region16: #{tpu_custom_call.1} parent=1 // pred_region
      %321 = dma.done [#allocation4], 32
    $region17: #{tpu_custom_call.1} parent=1 // pred_fallthru
      _
    %322 = vsyncpa [#allocation3], 1
    %323 = vsyncpa [#allocation4], 1

</llo_original>
